<compile_context>
chip_gen: v7x
topology: tpu7x:2x2x1
jax: 0.10.0
libtpu: 0.0.40
codegen_flags: <defaults>
</compile_context>

<pallas_src>
import jax
import jax.numpy as jnp
from jax.experimental import pallas as pl
from jax.experimental.pallas import tpu as pltpu


# ----------------------------------------------------------------------------- kernel


def _vgcn_fused_kernel(mask_ref, embt_ref, adj_ref, wcomb_ref, basebias_ref,
                       out_ref, acc_ref):
    """Fused per-(batch-block, graph) step.

    mask_ref     : (1, bb, V)      f32  graph-node membership mask for this batch block
    embt_ref     : (1, E, V)       bf16 word_embeddings(gv_ids).T for this graph
    adj_ref      : (1, V, V)       bf16 dense adjacency
    wcomb_ref    : (1, V, OUT_P)   bf16 folded weight W_vh @ W_fc.T (zero-padded lanes)
    basebias_ref : (E, OUT_P)      f32  batch-invariant sum_g (emb_t@A)@w_comb_g + bias
    out_ref      : (bb, E, OUT_P)  f32  output block (written on last graph; lane-dense)
    acc_ref      : (bb, E, OUT_P)  f32  VMEM accumulator of the per-batch correction
    """
    gi = pl.program_id(1)

    @pl.when(gi == 0)
    def _init():
        acc_ref[...] = jnp.zeros_like(acc_ref)

    nm = 1.0 - mask_ref[0]                                 # (bb, V) f32, exactly {0, 1}
    nm_bf = nm.astype(jnp.bfloat16)                        # lossless: values are {0, 1}
    emb_t = embt_ref[0]                                    # (E, V) bf16
    bb, v = nm.shape
    e = emb_t.shape[0]

    # Mask factoring: emb_t @ A_sub[b] = emb_t@A - ((emb_t*(1-m_b)) @ A)*(1-m_b).
    # Only the per-batch correction is computed here, packed as one (bb*E, V)@(V, V) matmul.
    x = (emb_t[None, :, :] * nm_bf[:, None, :]).reshape(bb * e, v)    # bf16
    corr = jnp.dot(x, adj_ref[0],
                   preferred_element_type=jnp.float32).reshape(bb, e, v)
    corr = corr * nm[:, None, :]                           # f32 elementwise (v5e VPU)

    # Accumulate corr @ (W_vh @ W_fc.T) over graphs, directly in the (padded) output basis.
    # TODO(synk): activation (None in default config) / training-mode dropout omitted; the
    #             W_fc folding is only algebraically valid in that regime.
    h = jnp.dot(corr.reshape(bb * e, v).astype(jnp.bfloat16), wcomb_ref[0],
                preferred_element_type=jnp.float32)        # (bb*E, OUT_P) f32
    acc_ref[...] += h.reshape(bb, e, -1)

    @pl.when(gi == pl.num_programs(1) - 1)
    def _finalize():
        # out[b] = [sum_g (emb_t@A)@w_comb_g + bias] - sum_g corr_b@w_comb_g
        out_ref[...] = (basebias_ref[...][None, :, :] - acc_ref[...]).astype(out_ref.dtype)


# ----------------------------------------------------------------------------- wrappers


def _pick_bb(batch: int) -> int:
    # Keep the batch block either equal to the full batch or a multiple of 8 (so the
    # second-to-last BlockSpec dim stays sublane-legal).  For batch >= 16 leave at least
    # 2 blocks on the "parallel" axis so v7x's second TensorCore has work.
    if batch >= 16:
        for bb in (32, 24, 16, 8):
            if batch % bb == 0 and batch // bb >= 2:
                return bb
    # TODO(synk): for tiny batches on v7x, add a second parallel grid axis over E tiles.
    return batch


def _vgcn_fused_pallas(mask, embt_bf, adjs_bf, wcomb_bf, base_bias, *, bb):
    G, B, V = mask.shape
    E = embt_bf.shape[1]
    OUT_P = wcomb_bf.shape[2]
    return pl.pallas_call(
        _vgcn_fused_kernel,
        out_shape=jax.ShapeDtypeStruct((B, E, OUT_P), jnp.float32),
        grid=(B // bb, G),
        in_specs=[
            pl.BlockSpec((1, bb, V), lambda bi, gi: (gi, bi, 0)),      # membership mask (f32)
            pl.BlockSpec((1, E, V), lambda bi, gi: (gi, 0, 0)),        # emb_t (bf16)
            pl.BlockSpec((1, V, V), lambda bi, gi: (gi, 0, 0)),        # adjacency (bf16)
            pl.BlockSpec((1, V, OUT_P), lambda bi, gi: (gi, 0, 0)),    # W_vh @ W_fc.T (bf16)
            pl.BlockSpec((E, OUT_P), lambda bi, gi: (0, 0)),           # base + bias (f32)
        ],
        out_specs=pl.BlockSpec((bb, E, OUT_P), lambda bi, gi: (bi, 0, 0)),
        scratch_shapes=[pltpu.VMEM((bb, E, OUT_P), jnp.float32)],
        compiler_params=pltpu.CompilerParams(
            dimension_semantics=("parallel", "arbitrary")),
    )(mask, embt_bf, adjs_bf, wcomb_bf, base_bias)


@jax.jit
def vocab_graph_convolution_forward(emb_table, input_ids, adjs, w_vhs,
                                    gv_ids, tok2graph, w_fc, b_fc):
    """Pallas port of VocabGraphConvolution.forward (inference; activation=None)."""
    G, V, _ = adjs.shape
    B = input_ids.shape[0]
    L = tok2graph.shape[1]
    E = emb_table.shape[1]
    OUT = w_fc.shape[0]
    OUT_P = ((OUT + 127) // 128) * 128        # lane-dense output / accumulator

    # --- glue: tokenizer-id -> graph-node membership mask (one_hot + max over S; no scatter)
    # (torch.unique's dedup is irrelevant for membership semantics; tokens absent from a
    #  graph map to node 0, harmless because adj row/col 0 are 0.)
    tmp_ids = jnp.where(input_ids > L - 1, 0, input_ids)                 # (B, S)
    gx_ids = tok2graph[:, tmp_ids]                                       # (G, B, S)
    mask = jax.nn.one_hot(gx_ids, V, dtype=jnp.float32).max(axis=2)      # (G, B, V)

    # --- glue: per-graph operands / batch-invariant terms (f32, one-off) ---
    emb_ts = jnp.swapaxes(jnp.take(emb_table, gv_ids, axis=0), 1, 2)     # (G, E, V) f32

    # Fold fc into the GCN weight (valid: activation=None, inference / no dropout).
    w_comb = jnp.einsum("gvh,oh->gvo", w_vhs, w_fc, precision="highest") # (G, V, OUT)
    w_comb = jnp.pad(w_comb, ((0, 0), (0, 0), (0, OUT_P - OUT)))         # (G, V, OUT_P)

    # Batch-invariant term: sum_g (emb_t @ A) @ w_comb_g + bias  -> (E, OUT_P)
    bases = jnp.einsum("gev,gvu->geu", emb_ts, adjs, precision="highest")        # (G, E, V)
    base_total = jnp.einsum("gev,gvo->eo", bases, w_comb, precision="highest")   # (E, OUT_P)
    b_pad = jnp.pad(b_fc, (0, OUT_P - OUT))
    base_bias = (base_total + b_pad[None, :]).astype(jnp.float32)

    bb = _pick_bb(B)
    assert B % bb == 0, "TODO(synk): pad batch to a multiple of the batch block"

    out_p = _vgcn_fused_pallas(
        mask,
        emb_ts.astype(jnp.bfloat16),
        adjs.astype(jnp.bfloat16),
        w_comb.astype(jnp.bfloat16),
        base_bias,
        bb=bb)                                                           # (B, E, OUT_P)

    # Slice away lane padding and do the cheap (0,2,1) transpose wrapper-side, keeping the
    # in-kernel stores lane-dense.
    return jnp.transpose(out_p[:, :, :OUT], (0, 2, 1))                   # (B, OUT, E)


# ----------------------------------------------------------------------------- reference


def _reference(emb_table, input_ids, adjs, w_vhs, gv_ids, tok2graph, w_fc, b_fc):
    G, V, _ = adjs.shape
    L = tok2graph.shape[1]
    fused = None
    for gi in range(G):
        adj, w_vh = adjs[gi], w_vhs[gi]
        tmp_ids = jnp.where(input_ids > L - 1, 0, input_ids)
        gx_ids = tok2graph[gi][tmp_ids]                                 # (B, S)
        member = (gx_ids[:, :, None] == jnp.arange(V)[None, None, :]).any(axis=1)
        m = member.astype(jnp.float32)                                  # (B, V)
        or_mask = jnp.maximum(m[:, :, None], m[:, None, :])             # (B, V, V)
        a_sub = adj[None] * or_mask
        h_vh = jnp.einsum("bvu,uh->bvh", a_sub, w_vh, precision="highest")
        emb_t = jnp.take(emb_table, gv_ids[gi], axis=0).T
        h_eh = jnp.einsum("ev,bvh->beh", emb_t, h_vh, precision="highest")
        fused = h_eh if fused is None else fused + h_eh
    out = jnp.einsum("beh,oh->beo", fused, w_fc, precision="highest") + b_fc[None, None, :]
    return jnp.transpose(out, (0, 2, 1))


# ----------------------------------------------------------------------------- main


if __name__ == "__main__":
    B, S = 2, 16            # batch, sequence length
    T_VOCAB = 256           # tokenizer vocabulary
    V = 128                 # word-graph vocabulary (adjacency size)
    E = 32                  # word embedding dim
    H = 64                  # hid_dim
    OUT = 32                # out_dim
    N_GRAPHS = 2

    key = jax.random.PRNGKey(0)
    keys = jax.random.split(key, 8)

    emb_table = 0.02 * jax.random.normal(keys[0], (T_VOCAB, E), dtype=jnp.float32)
    input_ids = jax.random.randint(keys[1], (B, S), 0, T_VOCAB, dtype=jnp.int32)

    adjs, w_vhs, gv_ids_l, t2g_l = [], [], [], []
    gkeys = jax.random.split(keys[2], N_GRAPHS)
    for gi in range(N_GRAPHS):
        k_adj, k_w, k_perm = jax.random.split(gkeys[gi], 3)
        dense = jax.random.uniform(k_adj, (V, V), dtype=jnp.float32)
        adj = jnp.where(dense > 0.9, dense, 0.0)          # ~10% dense adjacency values
        adj = adj.at[0, :].set(0.0).at[:, 0].set(0.0)     # node 0 never appears in indices
        adjs.append(adj)
        w_vhs.append(0.1 * jax.random.normal(k_w, (V, H), dtype=jnp.float32))
        gv = jax.random.permutation(k_perm, T_VOCAB)[:V].astype(jnp.int32)
        t2g = jnp.zeros((T_VOCAB,), jnp.int32).at[gv].set(jnp.arange(V, dtype=jnp.int32))
        gv_ids_l.append(gv)
        t2g_l.append(t2g)
    adjs = jnp.stack(adjs)              # (G, V, V)
    w_vhs = jnp.stack(w_vhs)            # (G, V, H)
    gv_ids = jnp.stack(gv_ids_l)        # (G, V)
    tok2graph = jnp.stack(t2g_l)        # (G, T_VOCAB)

    w_fc = 0.02 * jax.random.normal(keys[3], (OUT, H), dtype=jnp.float32)
    b_fc = 0.01 * jax.random.normal(keys[4], (OUT,), dtype=jnp.float32)

    # The mask factoring (and node-0 membership) relies on adj row/col 0 being zero,
    # which the torch module guarantees via `assert 0 not in g.indices()`.
    assert float(jnp.max(jnp.abs(adjs[:, 0, :]))) == 0.0
    assert float(jnp.max(jnp.abs(adjs[:, :, 0]))) == 0.0

    out = vocab_graph_convolution_forward(
        emb_table, input_ids, adjs, w_vhs, gv_ids, tok2graph, w_fc, b_fc)
    out = jax.block_until_ready(out)
    assert out.shape == (B, OUT, E), out.shape

    ref = _reference(emb_table, input_ids, adjs, w_vhs, gv_ids, tok2graph, w_fc, b_fc)
    # Tolerance loosened vs pure-f32: adjacency/embedding/weight matmul operands are bf16
    # in-kernel (f32 accumulation).
    assert jnp.allclose(out, ref, atol=5e-3, rtol=5e-2), float(jnp.max(jnp.abs(out - ref)))

    print("KERNEL_OK")
</pallas_src>

<mosaic_0001>
module attributes {stable_mosaic.version = 11 : i64} {
  func.func @_vgcn_fused_kernel(%arg0: i32, %arg1: i32, %arg2: memref<1x2x128xf32, #tpu.memory_space<vmem>>, %arg3: memref<1x32x128xbf16, #tpu.memory_space<vmem>>, %arg4: memref<1x128x128xbf16, #tpu.memory_space<vmem>>, %arg5: memref<1x128x128xbf16, #tpu.memory_space<vmem>>, %arg6: memref<32x128xf32, #tpu.memory_space<vmem>>, %arg7: memref<2x32x128xf32, #tpu.memory_space<vmem>>, %arg8: memref<2x32x128xf32, #tpu.memory_space<vmem>>) attributes {dimension_semantics = [#tpu.dimension_semantics<parallel>, #tpu.dimension_semantics<arbitrary>], iteration_bounds = array<i64: 1, 2>, scalar_prefetch = 0 : i64, scratch_operands = 1 : i64, tpu.core_type = #tpu.core_type<tc>, window_params = [{transform_indices = @transform_0, window_bounds = array<i64: 1, 2, 128>}, {transform_indices = @transform_1, window_bounds = array<i64: 1, 32, 128>}, {transform_indices = @transform_2, window_bounds = array<i64: 1, 128, 128>}, {transform_indices = @transform_3, window_bounds = array<i64: 1, 128, 128>}, {pipeline_mode = #tpu.pipeline_mode<synchronous>, transform_indices = @transform_4, window_bounds = array<i64: 32, 128>}, {transform_indices = @transform_5, window_bounds = array<i64: 2, 32, 128>}]} {
    %c0_i32 = arith.constant 0 : i32
    %0 = arith.cmpi eq, %arg1, %c0_i32 : i32
    %1 = arith.extui %0 : i1 to i32
    %c0_i32_0 = arith.constant 0 : i32
    %2 = arith.cmpi ne, %1, %c0_i32_0 : i32
    scf.if %2 {
      %cst_21 = arith.constant 0.000000e+00 : f32
      %35 = vector.broadcast %cst_21 : f32 to vector<2x32x128xf32>
      %c0_22 = arith.constant 0 : index
      %c0_23 = arith.constant 0 : index
      %c0_24 = arith.constant 0 : index
      %36 = vector.load %arg8[%c0_22, %c0_23, %c0_24] : memref<2x32x128xf32, #tpu.memory_space<vmem>>, vector<2x32x128xf32>
      tpu.vector_store %arg8[%c0_22, %c0_23, %c0_24], %35 {strides = array<i32>} : memref<2x32x128xf32, #tpu.memory_space<vmem>>, vector<2x32x128xf32>,
    } else {
    }
    %c0 = arith.constant 0 : index
    %c0_1 = arith.constant 0 : index
    %c0_2 = arith.constant 0 : index
    %3 = vector.load %arg2[%c0, %c0_1, %c0_2] : memref<1x2x128xf32, #tpu.memory_space<vmem>>, vector<1x2x128xf32>
    %4 = vector.shape_cast %3 : vector<1x2x128xf32> to vector<2x128xf32>
    %cst = arith.constant 1.000000e+00 : f32
    %5 = vector.broadcast %cst : f32 to vector<2x128xf32>
    %6 = arith.subf %5, %4 : vector<2x128xf32>
    %7 = arith.truncf %6 : vector<2x128xf32> to vector<2x128xbf16>
    %c0_3 = arith.constant 0 : index
    %c0_4 = arith.constant 0 : index
    %c0_5 = arith.constant 0 : index
    %8 = vector.load %arg3[%c0_3, %c0_4, %c0_5] : memref<1x32x128xbf16, #tpu.memory_space<vmem>>, vector<1x32x128xbf16>
    %9 = vector.shape_cast %8 : vector<1x32x128xbf16> to vector<32x128xbf16>
    %10 = vector.shape_cast %9 : vector<32x128xbf16> to vector<1x32x128xbf16>
    %11 = vector.shape_cast %7 : vector<2x128xbf16> to vector<2x1x128xbf16>
    %12 = vector.broadcast %10 : vector<1x32x128xbf16> to vector<2x32x128xbf16>
    %13 = vector.broadcast %11 : vector<2x1x128xbf16> to vector<2x32x128xbf16>
    %14 = arith.mulf %12, %13 : vector<2x32x128xbf16>
    %15 = vector.shape_cast %14 : vector<2x32x128xbf16> to vector<64x128xbf16>
    %c0_6 = arith.constant 0 : index
    %c0_7 = arith.constant 0 : index
    %c0_8 = arith.constant 0 : index
    %16 = vector.load %arg4[%c0_6, %c0_7, %c0_8] : memref<1x128x128xbf16, #tpu.memory_space<vmem>>, vector<1x128x128xbf16>
    %17 = vector.shape_cast %16 : vector<1x128x128xbf16> to vector<128x128xbf16>
    %cst_9 = arith.constant dense<0.000000e+00> : vector<64x128xf32>
    %18 = tpu.matmul %15, %17, %cst_9 {dimension_numbers = #tpu.dot_dimension_numbers<[1], [0], [0], [1], [0, 0, 1, 1], [], []>} : vector<64x128xbf16>, vector<128x128xbf16>, vector<64x128xf32> -> vector<64x128xf32>
    %19 = vector.shape_cast %18 : vector<64x128xf32> to vector<2x32x128xf32>
    %20 = vector.shape_cast %6 : vector<2x128xf32> to vector<2x1x128xf32>
    %21 = vector.broadcast %20 : vector<2x1x128xf32> to vector<2x32x128xf32>
    %22 = arith.mulf %19, %21 : vector<2x32x128xf32>
    %23 = vector.shape_cast %22 : vector<2x32x128xf32> to vector<64x128xf32>
    %24 = arith.truncf %23 : vector<64x128xf32> to vector<64x128xbf16>
    %c0_10 = arith.constant 0 : index
    %c0_11 = arith.constant 0 : index
    %c0_12 = arith.constant 0 : index
    %25 = vector.load %arg5[%c0_10, %c0_11, %c0_12] : memref<1x128x128xbf16, #tpu.memory_space<vmem>>, vector<1x128x128xbf16>
    %26 = vector.shape_cast %25 : vector<1x128x128xbf16> to vector<128x128xbf16>
    %cst_13 = arith.constant dense<0.000000e+00> : vector<64x128xf32>
    %27 = tpu.matmul %24, %26, %cst_13 {dimension_numbers = #tpu.dot_dimension_numbers<[1], [0], [0], [1], [0, 0, 1, 1], [], []>} : vector<64x128xbf16>, vector<128x128xbf16>, vector<64x128xf32> -> vector<64x128xf32>
    %c0_14 = arith.constant 0 : index
    %c0_15 = arith.constant 0 : index
    %c0_16 = arith.constant 0 : index
    %28 = vector.load %arg8[%c0_14, %c0_15, %c0_16] : memref<2x32x128xf32, #tpu.memory_space<vmem>>, vector<2x32x128xf32>
    %29 = vector.shape_cast %27 : vector<64x128xf32> to vector<2x32x128xf32>
    %30 = arith.addf %28, %29 : vector<2x32x128xf32>
    %c0_17 = arith.constant 0 : index
    %c0_18 = arith.constant 0 : index
    %c0_19 = arith.constant 0 : index
    %31 = vector.load %arg8[%c0_17, %c0_18, %c0_19] : memref<2x32x128xf32, #tpu.memory_space<vmem>>, vector<2x32x128xf32>
    tpu.vector_store %arg8[%c0_17, %c0_18, %c0_19], %30 {strides = array<i32>} : memref<2x32x128xf32, #tpu.memory_space<vmem>>, vector<2x32x128xf32>,
    %c1_i32 = arith.constant 1 : i32
    %32 = arith.cmpi eq, %arg1, %c1_i32 : i32
    %33 = arith.extui %32 : i1 to i32
    %c0_i32_20 = arith.constant 0 : i32
    %34 = arith.cmpi ne, %33, %c0_i32_20 : i32
    scf.if %34 {
      %c0_21 = arith.constant 0 : index
      %c0_22 = arith.constant 0 : index
      %35 = vector.load %arg6[%c0_21, %c0_22] : memref<32x128xf32, #tpu.memory_space<vmem>>, vector<32x128xf32>
      %36 = vector.shape_cast %35 : vector<32x128xf32> to vector<1x32x128xf32>
      %c0_23 = arith.constant 0 : index
      %c0_24 = arith.constant 0 : index
      %c0_25 = arith.constant 0 : index
      %37 = vector.load %arg8[%c0_23, %c0_24, %c0_25] : memref<2x32x128xf32, #tpu.memory_space<vmem>>, vector<2x32x128xf32>
      %38 = vector.broadcast %36 : vector<1x32x128xf32> to vector<2x32x128xf32>
      %39 = arith.subf %38, %37 : vector<2x32x128xf32>
      %c0_26 = arith.constant 0 : index
      %c0_27 = arith.constant 0 : index
      %c0_28 = arith.constant 0 : index
      %40 = vector.load %arg7[%c0_26, %c0_27, %c0_28] : memref<2x32x128xf32, #tpu.memory_space<vmem>>, vector<2x32x128xf32>
      tpu.vector_store %arg7[%c0_26, %c0_27, %c0_28], %39 {strides = array<i32>} : memref<2x32x128xf32, #tpu.memory_space<vmem>>, vector<2x32x128xf32>,
    } else {
    }
    return
  }
  func.func @transform_0(%arg0: i32, %arg1: i32) -> (i32, i32, i32) {
    %c0_i32 = arith.constant 0 : i32
    %c0_i32_0 = arith.constant 0 : i32
    return %arg1, %arg0, %c0_i32 : i32, i32, i32
  }
  func.func @transform_1(%arg0: i32, %arg1: i32) -> (i32, i32, i32) {
    %c0_i32 = arith.constant 0 : i32
    %c0_i32_0 = arith.constant 0 : i32
    %c0_i32_1 = arith.constant 0 : i32
    return %arg1, %c0_i32, %c0_i32_0 : i32, i32, i32
  }
  func.func @transform_2(%arg0: i32, %arg1: i32) -> (i32, i32, i32) {
    %c0_i32 = arith.constant 0 : i32
    %c0_i32_0 = arith.constant 0 : i32
    %c0_i32_1 = arith.constant 0 : i32
    return %arg1, %c0_i32, %c0_i32_0 : i32, i32, i32
  }
  func.func @transform_3(%arg0: i32, %arg1: i32) -> (i32, i32, i32) {
    %c0_i32 = arith.constant 0 : i32
    %c0_i32_0 = arith.constant 0 : i32
    %c0_i32_1 = arith.constant 0 : i32
    return %arg1, %c0_i32, %c0_i32_0 : i32, i32, i32
  }
  func.func @transform_4(%arg0: i32, %arg1: i32) -> (i32, i32) {
    %c0_i32 = arith.constant 0 : i32
    %c0_i32_0 = arith.constant 0 : i32
    %c0_i32_1 = arith.constant 0 : i32
    return %c0_i32, %c0_i32_0 : i32, i32
  }
  func.func @transform_5(%arg0: i32, %arg1: i32) -> (i32, i32, i32) {
    %c0_i32 = arith.constant 0 : i32
    %c0_i32_0 = arith.constant 0 : i32
    %c0_i32_1 = arith.constant 0 : i32
    return %arg0, %c0_i32, %c0_i32_0 : i32, i32, i32
  }
}

</mosaic_0001>

<llo_original>
// kernel: vocab_graph_convolution_forward.1
$region0: #{vocab_graph_convolution_forward.1}
  #allocation0 [shape = 'u32[]', space=smem, size = 0x4, offset = 0x4, fixed_abs, tag = 'smem constant byte address 0x4 - core index']
  #allocation1 [shape = 'u32[144,128]{1,0:T(1,128)}', space=vmem, size = 0x12000, scoped, tag = 'internal scratch']
  #allocation2 [shape = 'f32[2,32,128]{2,1,0:T(8,128)}', space=vmem, size = 0x8000, scoped, tag = 'scratch operand']
  %s0 = inlined_call_operand.vmem [shape: f32[2,2,128], index: 0, kind: input, shape index: {}]
  %s1 = inlined_call_operand.vmem [shape: bf16[2,32,128], index: 1, kind: input, shape index: {}]
  %s2 = inlined_call_operand.vmem [shape: bf16[2,128,128], index: 2, kind: input, shape index: {}]
  %s3 = inlined_call_operand.vmem [shape: bf16[2,128,128], index: 3, kind: input, shape index: {}]
  %s4 = inlined_call_operand.vmem [shape: f32[32,128], index: 4, kind: input, shape index: {}]
  %s5 = inlined_call_operand.vmem [shape: f32[2,32,128], index: 5, kind: output, shape index: {}]
  %s6 = sld [smem:[#allocation0]]
  $region61: #{vocab_graph_convolution_forward.1} parent=0
    _
  %s8 = ssub.s32 1, %s6
  %s9 = scalar_select 0, %s8, %s6
  loop: start=0, step=1, limit=4
  $region2: #{vocab_graph_convolution_forward.1} parent=0 // loop_pre_header
    _
  $region3: #{vocab_graph_convolution_forward.1} parent=0 // loop_header
    %s11 = sphi 0, %s15
    %p12 = scmp.ge.s32.totalorder %s11, 4
    %s18 = sphi 0, %s30
    %s19 = sphi 0, %s26
    %s20 = sphi 0, %s18
    %s21 = sphi 0, %s19
    %s22 = sphi 0, %s20
    %s23 = sphi 0, %s21
    %s35 = sphi 0, %s37
    %s38 = sphi 0, %s35
    %s39 = sphi 0, %s38
    %s55 = sphi 0, %s39
    %s61 = sphi 0, %s63
    %s64 = sphi 0, %s61
    %s65 = sphi 0, %s64
    %s81 = sphi 0, %s65
    %s87 = sphi 0, %s89
    %s90 = sphi 0, %s87
    %s91 = sphi 0, %s90
    %s107 = sphi 0, %s91
    %s113 = sphi 0, %s115
    %s116 = sphi 0, %s113
    %s117 = sphi 0, %s116
    %s133 = sphi 0, %s117
    %s137 = sphi 0, %s137
    %s139 = sphi 0, %s137
    %s140 = sphi 0, %s139
    %s154 = sphi 0, %s140
    %s160 = sphi 0, %s162
    %s163 = sphi 0, %s160
    %s164 = sphi 0, %s163
    %s180 = sphi 0, %s164
  $region4: #{vocab_graph_convolution_forward.1} parent=0 // loop_header_branch
    %14 = sbr.rel (%p12) target = $region8
  $region5: #{vocab_graph_convolution_forward.1} parent=0 // loop_body
    %s16 = ssub.s32 %s11, 1
    %s17 = ssub.s32 %s11, 2
    %s24 = sadd.s32 1, %s19
    %p25 = scmp.ge.s32.totalorder %s24, 2
    %s26 = scalar_select %p25, 0, %s24
    %s27 = sadd.s32 1, %s18
    %s28 = scalar_select %p25, %s27, %s18
    %p29 = scmp.ge.s32.totalorder %s28, 1
    %s30 = scalar_select %p29, 0, %s28
    %s31 = ssub.s32 %s19, %s26
    %s32 = ssub.s32 %s18, %s30
    %s33 = sor.u32 %s31, %s32
    %p34 = scmp.eq.s32.totalorder %s33, 0
    %s36 = sadd.s32 %s35, 1
    %s37 = scalar_select %p34, %s35, %s36
    %p40 = pneg %p34
    %p41 = scmp.eq.s32.totalorder %s11, 1
    %p42 = por %p40, %p41
    %p43 = scmp.ne.s32.totalorder %s35, %s38
    %p44 = scmp.eq.s32.totalorder %s11, 0
    %p45 = por %p43, %p44
    %p46 = scmp.ne.s32.totalorder %s35, %s38
    %p47 = scmp.eq.s32.totalorder %s16, 1
    %p48 = por %p46, %p47
    %p49 = scmp.ne.s32.totalorder %s38, %s39
    %p50 = scmp.eq.s32.totalorder %s16, 0
    %p51 = por %p49, %p50
    %p52 = scmp.ne.s32.totalorder %s38, %s39
    %p53 = scmp.eq.s32.totalorder %s17, 1
    %p54 = por %p52, %p53
    %p56 = scmp.ne.s32.totalorder %s39, %s55
    %p57 = scmp.eq.s32.totalorder %s17, 0
    %p58 = por %p56, %p57
    %s59 = ssub.s32 %s19, %s26
    %p60 = scmp.eq.s32.totalorder %s59, 0
    %s62 = sadd.s32 %s61, 1
    %s63 = scalar_select %p60, %s61, %s62
    %p66 = pneg %p60
    %p67 = scmp.eq.s32.totalorder %s11, 1
    %p68 = por %p66, %p67
    %p69 = scmp.ne.s32.totalorder %s61, %s64
    %p70 = scmp.eq.s32.totalorder %s11, 0
    %p71 = por %p69, %p70
    %p72 = scmp.ne.s32.totalorder %s61, %s64
    %p73 = scmp.eq.s32.totalorder %s16, 1
    %p74 = por %p72, %p73
    %p75 = scmp.ne.s32.totalorder %s64, %s65
    %p76 = scmp.eq.s32.totalorder %s16, 0
    %p77 = por %p75, %p76
    %p78 = scmp.ne.s32.totalorder %s64, %s65
    %p79 = scmp.eq.s32.totalorder %s17, 1
    %p80 = por %p78, %p79
    %p82 = scmp.ne.s32.totalorder %s65, %s81
    %p83 = scmp.eq.s32.totalorder %s17, 0
    %p84 = por %p82, %p83
    %s85 = ssub.s32 %s19, %s26
    %p86 = scmp.eq.s32.totalorder %s85, 0
    %s88 = sadd.s32 %s87, 1
    %s89 = scalar_select %p86, %s87, %s88
    %p92 = pneg %p86
    %p93 = scmp.eq.s32.totalorder %s11, 1
    %p94 = por %p92, %p93
    %p95 = scmp.ne.s32.totalorder %s87, %s90
    %p96 = scmp.eq.s32.totalorder %s11, 0
    %p97 = por %p95, %p96
    %p98 = scmp.ne.s32.totalorder %s87, %s90
    %p99 = scmp.eq.s32.totalorder %s16, 1
    %p100 = por %p98, %p99
    %p101 = scmp.ne.s32.totalorder %s90, %s91
    %p102 = scmp.eq.s32.totalorder %s16, 0
    %p103 = por %p101, %p102
    %p104 = scmp.ne.s32.totalorder %s90, %s91
    %p105 = scmp.eq.s32.totalorder %s17, 1
    %p106 = por %p104, %p105
    %p108 = scmp.ne.s32.totalorder %s91, %s107
    %p109 = scmp.eq.s32.totalorder %s17, 0
    %p110 = por %p108, %p109
    %s111 = ssub.s32 %s19, %s26
    %p112 = scmp.eq.s32.totalorder %s111, 0
    %s114 = sadd.s32 %s113, 1
    %s115 = scalar_select %p112, %s113, %s114
    %p118 = pneg %p112
    %p119 = scmp.eq.s32.totalorder %s11, 1
    %p120 = por %p118, %p119
    %p121 = scmp.ne.s32.totalorder %s113, %s116
    %p122 = scmp.eq.s32.totalorder %s11, 0
    %p123 = por %p121, %p122
    %p124 = scmp.ne.s32.totalorder %s113, %s116
    %p125 = scmp.eq.s32.totalorder %s16, 1
    %p126 = por %p124, %p125
    %p127 = scmp.ne.s32.totalorder %s116, %s117
    %p128 = scmp.eq.s32.totalorder %s16, 0
    %p129 = por %p127, %p128
    %p130 = scmp.ne.s32.totalorder %s116, %s117
    %p131 = scmp.eq.s32.totalorder %s17, 1
    %p132 = por %p130, %p131
    %p134 = scmp.ne.s32.totalorder %s117, %s133
    %p135 = scmp.eq.s32.totalorder %s17, 0
    %p136 = por %p134, %p135
    %s138 = sadd.s32 %s137, 1
    %p141 = scmp.eq.s32.totalorder %s11, 1
    %p142 = scmp.ne.s32.totalorder %s137, %s139
    %p143 = scmp.eq.s32.totalorder %s11, 0
    %p144 = por %p142, %p143
    %p145 = scmp.ne.s32.totalorder %s137, %s139
    %p146 = scmp.eq.s32.totalorder %s16, 1
    %p147 = por %p145, %p146
    %p148 = scmp.ne.s32.totalorder %s139, %s140
    %p149 = scmp.eq.s32.totalorder %s16, 0
    %p150 = por %p148, %p149
    %p151 = scmp.ne.s32.totalorder %s139, %s140
    %p152 = scmp.eq.s32.totalorder %s17, 1
    %p153 = por %p151, %p152
    %p155 = scmp.ne.s32.totalorder %s140, %s154
    %p156 = scmp.eq.s32.totalorder %s17, 0
    %p157 = por %p155, %p156
    %s158 = ssub.s32 %s18, %s30
    %p159 = scmp.eq.s32.totalorder %s158, 0
    %s161 = sadd.s32 %s160, 1
    %s162 = scalar_select %p159, %s160, %s161
    %p165 = pneg %p159
    %p166 = scmp.eq.s32.totalorder %s11, 1
    %p167 = por %p165, %p166
    %p168 = scmp.ne.s32.totalorder %s160, %s163
    %p169 = scmp.eq.s32.totalorder %s11, 0
    %p170 = por %p168, %p169
    %p171 = scmp.ne.s32.totalorder %s160, %s163
    %p172 = scmp.eq.s32.totalorder %s16, 1
    %p173 = por %p171, %p172
    %p174 = scmp.ne.s32.totalorder %s163, %s164
    %p175 = scmp.eq.s32.totalorder %s16, 0
    %p176 = por %p174, %p175
    %p177 = scmp.ne.s32.totalorder %s163, %s164
    %p178 = scmp.eq.s32.totalorder %s17, 1
    %p179 = por %p177, %p178
    %p181 = scmp.ne.s32.totalorder %s164, %s180
    %p182 = scmp.eq.s32.totalorder %s17, 0
    %p183 = por %p181, %p182
    %p184 = scmp.le.s32.totalorder 1, %s11
    %p185 = scmp.lt.s32.totalorder %s11, 3
    %p186 = pnand %p184, %p185
    %p187 = pneg %p186
    // Predicated region
    $region9: #{vocab_graph_convolution_forward.1} parent=5 // pred_check
      _
    $region10: #{vocab_graph_convolution_forward.1} parent=5 // pred_check_branch
      %189 = sbr.rel (%p186) target = $region12
    $region11: #{vocab_graph_convolution_forward.1} parent=5 // pred_region
      %s190 = ssub.s32 %s11, 1
      // Predicated region
      $region13: #{vocab_graph_convolution_forward.1} parent=11 // pred_check
        %p191 = pneg %p150
      $region14: #{vocab_graph_convolution_forward.1} parent=11 // pred_check_branch
        %193 = sbr.rel (%p191) target = $region16
      $region15: #{vocab_graph_convolution_forward.1} parent=11 // pred_region
        _
      $region16: #{vocab_graph_convolution_forward.1} parent=11 // pred_fallthru
        _
    $region12: #{vocab_graph_convolution_forward.1} parent=5 // pred_fallthru
      _
    %p194 = scmp.lt.s32.totalorder %s11, 2
    // Predicated region
    $region17: #{vocab_graph_convolution_forward.1} parent=5 // pred_check
      %p195 = pneg %p194
    $region18: #{vocab_graph_convolution_forward.1} parent=5 // pred_check_branch
      %197 = sbr.rel (%p195) target = $region20
    $region19: #{vocab_graph_convolution_forward.1} parent=5 // pred_region
      // Predicated region
      $region21: #{vocab_graph_convolution_forward.1} parent=19 // pred_check
        %p198 = pneg %p45
      $region22: #{vocab_graph_convolution_forward.1} parent=19 // pred_check_branch
        %200 = sbr.rel (%p198) target = $region24
      $region23: #{vocab_graph_convolution_forward.1} parent=19 // pred_region
        %p201 = scmp.lt.s32.totalorder %s19, 1
        %s202 = scalar_select %p201, %s19, 1
        %p203 = scmp.lt.s32.totalorder %s18, 0
        %s204 = scalar_select %p203, %s18, 0
        %s205 = sadd.s32 %s204, %s202
        %s206 = smul.addr %s205, 2
        %s207 = scalar_lea.vmem %s0, %s206
      $region24: #{vocab_graph_convolution_forward.1} parent=19 // pred_fallthru
        _
      // Predicated region
      $region25: #{vocab_graph_convolution_forward.1} parent=19 // pred_check
        %p208 = pneg %p71
      $region26: #{vocab_graph_convolution_forward.1} parent=19 // pred_check_branch
        %210 = sbr.rel (%p208) target = $region28
      $region27: #{vocab_graph_convolution_forward.1} parent=19 // pred_region
        %p211 = scmp.lt.s32.totalorder %s19, 1
        %s212 = scalar_select %p211, %s19, 1
        %s213 = smul.addr %s212, 4
        %s214 = smul.addr %s213, 4
        %s215 = scalar_lea.vmem %s1, %s214
      $region28: #{vocab_graph_convolution_forward.1} parent=19 // pred_fallthru
        _
      // Predicated region
      $region29: #{vocab_graph_convolution_forward.1} parent=19 // pred_check
        %p216 = pneg %p97
      $region30: #{vocab_graph_convolution_forward.1} parent=19 // pred_check_branch
        %218 = sbr.rel (%p216) target = $region32
      $region31: #{vocab_graph_convolution_forward.1} parent=19 // pred_region
        %p219 = scmp.lt.s32.totalorder %s19, 1
        %s220 = scalar_select %p219, %s19, 1
        %s221 = smul.addr %s220, 16
        %s222 = smul.addr %s221, 4
        %s223 = scalar_lea.vmem %s2, %s222
      $region32: #{vocab_graph_convolution_forward.1} parent=19 // pred_fallthru
        _
      // Predicated region
      $region33: #{vocab_graph_convolution_forward.1} parent=19 // pred_check
        %p224 = pneg %p123
      $region34: #{vocab_graph_convolution_forward.1} parent=19 // pred_check_branch
        %226 = sbr.rel (%p224) target = $region36
      $region35: #{vocab_graph_convolution_forward.1} parent=19 // pred_region
        %p227 = scmp.lt.s32.totalorder %s19, 1
        %s228 = scalar_select %p227, %s19, 1
        %s229 = smul.addr %s228, 16
        %s230 = smul.addr %s229, 4
        %s231 = scalar_lea.vmem %s3, %s230
      $region36: #{vocab_graph_convolution_forward.1} parent=19 // pred_fallthru
        _
    $region20: #{vocab_graph_convolution_forward.1} parent=5 // pred_fallthru
      _
    %p232 = scmp.le.s32.totalorder 1, %s11
    %p233 = scmp.lt.s32.totalorder %s11, 3
    %p234 = pnand %p232, %p233
    %p235 = pneg %p234
    // Predicated region
    $region37: #{vocab_graph_convolution_forward.1} parent=5 // pred_check
      _
    $region38: #{vocab_graph_convolution_forward.1} parent=5 // pred_check_branch
      %237 = sbr.rel (%p234) target = $region40
    $region39: #{vocab_graph_convolution_forward.1} parent=5 // pred_region
      %s238 = ssub.s32 %s11, 1
      %p239 = scmp.lt.s32.totalorder %s21, 1
      %s240 = scalar_select %p239, %s21, 1
      %p241 = scmp.lt.s32.totalorder %s20, 0
      %s242 = scalar_select %p241, %s20, 0
      %s243 = sadd.s32 %s242, %s240
      %s244 = smul.addr %s243, 2
      %s245 = scalar_lea.vmem %s0, %s244
      %p246 = pneg %p51
      %p247 = pneg %p48
      %p248 = scmp.lt.s32.totalorder %s21, 1
      %s249 = scalar_select %p248, %s21, 1
      %s250 = smul.addr %s249, 4
      %s251 = smul.addr %s250, 4
      %s252 = scalar_lea.vmem %s1, %s251
      %p253 = pneg %p77
      %p254 = pneg %p74
      %p255 = scmp.lt.s32.totalorder %s21, 1
      %s256 = scalar_select %p255, %s21, 1
      %s257 = smul.addr %s256, 16
      %s258 = smul.addr %s257, 4
      %s259 = scalar_lea.vmem %s2, %s258
      %p260 = pneg %p103
      %p261 = pneg %p100
      %p262 = scmp.lt.s32.totalorder %s21, 1
      %s263 = scalar_select %p262, %s21, 1
      %s264 = smul.addr %s263, 16
      %s265 = smul.addr %s264, 4
      %s266 = scalar_lea.vmem %s3, %s265
      %p267 = pneg %p129
      %p268 = pneg %p126
      %p269 = pneg %p150
      %p270 = pneg %p147
      %p271 = pneg %p176
      %p272 = pneg %p173
      %s273 = smul.u32 2, %s20
      %p274 = scmp.lt.s32.totalorder %s273, 1
      %s275 = scalar_select %p274, %s273, 1
      %s276 = smul.addr %s275, 4
      %s277 = smul.addr %s276, 8
      %s278 = scalar_lea.vmem %s5, %s277
      %p279 = scmp.lt.s32.totalorder %s21, 1
      %s280 = scalar_select %p279, %s21, 1
      %p281 = scmp.lt.s32.totalorder %s20, 0
      %s282 = scalar_select %p281, %s20, 0
      %s283 = sadd.s32 %s282, %s280
      %s284 = smul.addr %s283, 2
      %s285 = scalar_lea.vmem %s0, %s284
      %p286 = scmp.lt.s32.totalorder %s21, 1
      %s287 = scalar_select %p286, %s21, 1
      %s288 = smul.addr %s287, 4
      %s289 = smul.addr %s288, 4
      %s290 = scalar_lea.vmem %s1, %s289
      %p291 = scmp.lt.s32.totalorder %s21, 1
      %s292 = scalar_select %p291, %s21, 1
      %s293 = smul.addr %s292, 16
      %s294 = smul.addr %s293, 4
      %s295 = scalar_lea.vmem %s2, %s294
      %p296 = scmp.lt.s32.totalorder %s21, 1
      %s297 = scalar_select %p296, %s21, 1
      %s298 = smul.addr %s297, 16
      %s299 = smul.addr %s298, 4
      %s300 = scalar_lea.vmem %s3, %s299
      %s301 = smul.u32 2, %s20
      %p302 = scmp.lt.s32.totalorder %s301, 1
      %s303 = scalar_select %p302, %s301, 1
      %s304 = smul.addr %s303, 4
      %s305 = smul.addr %s304, 8
      %s306 = scalar_lea.vmem %s5, %s305
      %s307 = smul.u32 2, %s20
      %p309 = scmp.eq.s32.totalorder %s21, 0
      // Predicated region
      $region41: #{vocab_graph_convolution_forward.1} parent=39 // pred_check
        %p310 = pneg %p309
      $region42: #{vocab_graph_convolution_forward.1} parent=39 // pred_check_branch
        %312 = sbr.rel (%p310) target = $region44
      $region43: #{vocab_graph_convolution_forward.1} parent=39 // pred_region
        %313 = vst [vmem:[#allocation2] sm:$0xff] 0.0
        %314 = vst [vmem:[#allocation2 + $0x8] sm:$0xff] 0.0
        %315 = vst [vmem:[#allocation2 + $0x10] sm:$0xff] 0.0
        %316 = vst [vmem:[#allocation2 + $0x18] sm:$0xff] 0.0
        %317 = vst [vmem:[#allocation2 + $0x20] sm:$0xff] 0.0
        %318 = vst [vmem:[#allocation2 + $0x28] sm:$0xff] 0.0
        %319 = vst [vmem:[#allocation2 + $0x30] sm:$0xff] 0.0
        %320 = vst [vmem:[#allocation2 + $0x38] sm:$0xff] 0.0
      $region44: #{vocab_graph_convolution_forward.1} parent=39 // pred_fallthru
        _
      %v321 = vld [vmem:[%s285] sm:$0x3]
      %v322 = vsub.f32 1.0, %v321
      %v323 = vpack.c.bf16 %v322, %v322
      %v324 = vld [vmem:[%s290] sm:$0xf]
      %v325 = vld [vmem:[%s290 + $0x4] sm:$0xf]
      %v326 = vld [vmem:[%s290 + $0x8] sm:$0xf]
      %v327 = vld [vmem:[%s290 + $0xc] sm:$0xf]
      %v330 = vunpack.c.l.s4 1966171168
      %v331 = vunpack.c.0.s8 %v330
      %v332 = vlaneseq
      %v333 = vshrl.u32 %v332, 7
      %v334 = vsub.s32 %v331, %v333
      %v335 = vrot.slane %v323, %v334
      %v337 = vunpack.c.l.s4 1966171168
      %v338 = vunpack.c.0.s8 %v337
      %v339 = vlaneseq
      %v340 = vshrl.u32 %v339, 7
      %v341 = vsub.s32 %v338, %v340
      %v342 = vrot.slane %v335, %v341
      %v343 = vunpack.i.l.s16 %v342
      %v344 = vunpack.i.h.s16 %v342
      %v345 = vpack.i.b16 %v343, %v343
      %v346 = vpack.i.b16 %v344, %v344
      %v347 = vlaneseq
      %v348 = vshrl.u32 %v347, 7
      %v349 = vsub.s32 0, %v348
      %v350 = vrot.slane %v345, %v349
      %v351 = vlaneseq
      %v352 = vshrl.u32 %v351, 7
      %v353 = vsub.s32 0, %v352
      %v354 = vrot.slane %v346, %v353
      %v356 = vpack.i.b16 %v350, %v350
      %v358 = vlaneseq
      %v359 = vshrl.u32 %v358, 7
      %v360 = vsub.s32 0, %v359
      %v361 = vrot.slane %v356, %v360
      %v363 = vpack.i.b16 %v354, %v354
      %v365 = vlaneseq
      %v366 = vshrl.u32 %v365, 7
      %v367 = vsub.s32 0, %v366
      %v368 = vrot.slane %v363, %v367
      %v371 = vunpack.c.l.b16 %v361
      %v372 = vunpack.c.l.b16 %v368
      %v373 = vpack.c.b16 %v371, %v371
      %v374 = vpack.c.b16 %v372, %v372
      %v377 = vmul.bf16 %v324, %v373
      %v378 = vmul.bf16 %v325, %v373
      %v379 = vmul.bf16 %v326, %v373
      %v380 = vmul.bf16 %v327, %v373
      %v381 = vmul.bf16 %v324, %v374
      %v382 = vmul.bf16 %v325, %v374
      %v383 = vmul.bf16 %v326, %v374
      %v384 = vmul.bf16 %v327, %v374
      %v385 = vld [vmem:[%s295] sm:$0xf]
      %v386 = vld [vmem:[%s295 + $0x4] sm:$0xf]
      %v387 = vld [vmem:[%s295 + $0x8] sm:$0xf]
      %v388 = vld [vmem:[%s295 + $0xc] sm:$0xf]
      %v389 = vld [vmem:[%s295 + $0x10] sm:$0xf]
      %v390 = vld [vmem:[%s295 + $0x14] sm:$0xf]
      %v391 = vld [vmem:[%s295 + $0x18] sm:$0xf]
      %v392 = vld [vmem:[%s295 + $0x1c] sm:$0xf]
      %v393 = vld [vmem:[%s295 + $0x20] sm:$0xf]
      %v394 = vld [vmem:[%s295 + $0x24] sm:$0xf]
      %v395 = vld [vmem:[%s295 + $0x28] sm:$0xf]
      %v396 = vld [vmem:[%s295 + $0x2c] sm:$0xf]
      %v397 = vld [vmem:[%s295 + $0x30] sm:$0xf]
      %v398 = vld [vmem:[%s295 + $0x34] sm:$0xf]
      %v399 = vld [vmem:[%s295 + $0x38] sm:$0xf]
      %v400 = vld [vmem:[%s295 + $0x3c] sm:$0xf]
      %v409 = vunpack.c.l.b16 %v377
      %v410 = vunpack.c.l.b16 %v378
      %v411 = vunpack.c.l.b16 %v379
      %v412 = vunpack.c.l.b16 %v380
      %v413 = vunpack.c.l.b16 %v381
      %v414 = vunpack.c.l.b16 %v382
      %v415 = vunpack.c.l.b16 %v383
      %v416 = vunpack.c.l.b16 %v384
      %v417 = vpack.c.b16 %v410, %v409
      %v418 = vpack.c.b16 %v412, %v411
      %v419 = vpack.c.b16 %v414, %v413
      %v420 = vpack.c.b16 %v416, %v415
      %v441 = vunpack.c.l.b16 %v385
      %v442 = vunpack.c.l.b16 %v386
      %v443 = vunpack.c.l.b16 %v387
      %v444 = vunpack.c.l.b16 %v388
      %v445 = vunpack.c.l.b16 %v389
      %v446 = vunpack.c.l.b16 %v390
      %v447 = vunpack.c.l.b16 %v391
      %v448 = vunpack.c.l.b16 %v392
      %v449 = vunpack.c.l.b16 %v393
      %v450 = vunpack.c.l.b16 %v394
      %v451 = vunpack.c.l.b16 %v395
      %v452 = vunpack.c.l.b16 %v396
      %v453 = vunpack.c.l.b16 %v397
      %v454 = vunpack.c.l.b16 %v398
      %v455 = vunpack.c.l.b16 %v399
      %v456 = vunpack.c.l.b16 %v400
      %v457 = vpack.c.b16 %v442, %v441
      %v458 = vpack.c.b16 %v444, %v443
      %v459 = vpack.c.b16 %v446, %v445
      %v460 = vpack.c.b16 %v448, %v447
      %v461 = vpack.c.b16 %v450, %v449
      %v462 = vpack.c.b16 %v452, %v451
      %v463 = vpack.c.b16 %v454, %v453
      %v464 = vpack.c.b16 %v456, %v455
      %473 = vmatprep.subr.bf16.mxu0 0
      %474 = vmatpush1.bf16.msra.mxu0 %v457
      %475 = vmatprep.subr.bf16.mxu0 0
      %476 = vmatpush1.bf16.msra.mxu0 %v458
      %477 = vmatprep.subr.bf16.mxu0 0
      %478 = vmatpush1.bf16.msra.mxu0 %v459
      %479 = vmatprep.subr.bf16.mxu0 0
      %480 = vmatpush1.bf16.msra.mxu0 %v460
      %481 = vmatprep.subr.bf16.mxu0 0
      %482 = vmatpush1.bf16.msra.mxu0 %v461
      %483 = vmatprep.subr.bf16.mxu0 0
      %484 = vmatpush1.bf16.msra.mxu0 %v462
      %485 = vmatprep.subr.bf16.mxu0 0
      %486 = vmatpush1.bf16.msra.mxu0 %v463
      %487 = vmatprep.subr.bf16.mxu0 0
      %488 = vmatpush1.bf16.msra.mxu0 %v464
      %489 = vmatprep.subr.bf16.mxu0 0
      %490 = vmatpush1.bf16.msra.mxu0 0
      %491 = vmatprep.subr.bf16.mxu0 0
      %492 = vmatpush1.bf16.msra.mxu0 0
      %493 = vmatprep.subr.bf16.mxu0 0
      %494 = vmatpush1.bf16.msra.mxu0 0
      %495 = vmatprep.subr.bf16.mxu0 0
      %496 = vmatpush1.bf16.msra.mxu0 0
      %497 = vmatprep.subr.bf16.mxu0 0
      %498 = vmatpush1.bf16.msra.mxu0 0
      %499 = vmatprep.subr.bf16.mxu0 0
      %500 = vmatpush1.bf16.msra.mxu0 0
      %501 = vmatprep.subr.bf16.mxu0 0
      %502 = vmatpush1.bf16.msra.mxu0 0
      %503 = vmatprep.subr.bf16.mxu0 0
      %504 = vmatpush1.bf16.msra.mxu0 0
      %505 = vmatprep.mubr.bf16.mxu0 0
      %506 = vmatmul.mubr.bf16.gmra.mrb[0].mxu0 %v417
      %v507 = vpop.f32.mrb[0].mxu0
      %v508 = vadd.f32 0.0, %v507
      %v509 = vpop.f32.mrb[0].mxu0
      %v510 = vpop.f32.mrb[0].mxu0
      %v511 = vadd.f32 0.0, %v510
      %v512 = vpop.f32.mrb[0].mxu0
      %513 = vmatprep.mubr.bf16.mxu0 0
      %514 = vmatmul.mubr.bf16.gmra.mrb[0].mxu0 %v418
      %v515 = vpop.f32.mrb[0].mxu0
      %v516 = vadd.f32 0.0, %v515
      %v517 = vpop.f32.mrb[0].mxu0
      %v518 = vpop.f32.mrb[0].mxu0
      %v519 = vadd.f32 0.0, %v518
      %v520 = vpop.f32.mrb[0].mxu0
      %521 = vmatprep.mubr.bf16.mxu0 0
      %522 = vmatmul.mubr.bf16.gmra.mrb[0].mxu0 %v419
      %v523 = vpop.f32.mrb[0].mxu0
      %v524 = vadd.f32 0.0, %v523
      %v525 = vpop.f32.mrb[0].mxu0
      %v526 = vpop.f32.mrb[0].mxu0
      %v527 = vadd.f32 0.0, %v526
      %v528 = vpop.f32.mrb[0].mxu0
      %529 = vmatprep.mubr.bf16.mxu0 0
      %530 = vmatmul.mubr.bf16.gmra.mrb[0].mxu0 %v420
      %v531 = vpop.f32.mrb[0].mxu0
      %v532 = vadd.f32 0.0, %v531
      %v533 = vpop.f32.mrb[0].mxu0
      %v534 = vpop.f32.mrb[0].mxu0
      %v535 = vadd.f32 0.0, %v534
      %v536 = vpop.f32.mrb[0].mxu0
      %537 = vdwg.mxu0
      %v540 = vunpack.c.l.s4 1966171168
      %v541 = vunpack.c.0.s8 %v540
      %v542 = vlaneseq
      %v543 = vshrl.u32 %v542, 7
      %v544 = vsub.s32 %v541, %v543
      %v545 = vrot.slane %v322, %v544
      %v546 = vcombine.high %v545, %v545
      %v548 = vunpack.c.l.s4 1966171168
      %v549 = vunpack.c.0.s8 %v548
      %v550 = vlaneseq
      %v551 = vshrl.u32 %v550, 7
      %v552 = vsub.s32 %v549, %v551
      %v553 = vrot.slane %v545, %v552
      %v555 = vunpack.c.l.s4 1966171168
      %v556 = vunpack.c.0.s8 %v555
      %v557 = vlaneseq
      %v558 = vshrl.u32 %v557, 7
      %v559 = vsub.s32 %v556, %v558
      %v560 = vrot.slane %v546, %v559
      %v561 = vlaneseq
      %v562 = vshrl.u32 %v561, 7
      %v563 = vsub.s32 0, %v562
      %v564 = vrot.slane %v553, %v563
      %v565 = vlaneseq
      %v566 = vshrl.u32 %v565, 7
      %v567 = vsub.s32 0, %v566
      %v568 = vrot.slane %v560, %v567
      %v571 = vmul.f32 %v508, %v564
      %v572 = vmul.f32 %v511, %v564
      %v573 = vmul.f32 %v516, %v564
      %v574 = vmul.f32 %v519, %v564
      %v575 = vmul.f32 %v524, %v568
      %v576 = vmul.f32 %v527, %v568
      %v577 = vmul.f32 %v532, %v568
      %v578 = vmul.f32 %v535, %v568
      %v579 = vpack.c.bf16 %v572, %v571
      %v580 = vpack.c.bf16 %v574, %v573
      %v581 = vpack.c.bf16 %v576, %v575
      %v582 = vpack.c.bf16 %v578, %v577
      %v583 = vld [vmem:[%s300] sm:$0xf]
      %v584 = vld [vmem:[%s300 + $0x4] sm:$0xf]
      %v585 = vld [vmem:[%s300 + $0x8] sm:$0xf]
      %v586 = vld [vmem:[%s300 + $0xc] sm:$0xf]
      %v587 = vld [vmem:[%s300 + $0x10] sm:$0xf]
      %v588 = vld [vmem:[%s300 + $0x14] sm:$0xf]
      %v589 = vld [vmem:[%s300 + $0x18] sm:$0xf]
      %v590 = vld [vmem:[%s300 + $0x1c] sm:$0xf]
      %v591 = vld [vmem:[%s300 + $0x20] sm:$0xf]
      %v592 = vld [vmem:[%s300 + $0x24] sm:$0xf]
      %v593 = vld [vmem:[%s300 + $0x28] sm:$0xf]
      %v594 = vld [vmem:[%s300 + $0x2c] sm:$0xf]
      %v595 = vld [vmem:[%s300 + $0x30] sm:$0xf]
      %v596 = vld [vmem:[%s300 + $0x34] sm:$0xf]
      %v597 = vld [vmem:[%s300 + $0x38] sm:$0xf]
      %v598 = vld [vmem:[%s300 + $0x3c] sm:$0xf]
      %v615 = vunpack.c.l.b16 %v583
      %v616 = vunpack.c.l.b16 %v584
      %v617 = vunpack.c.l.b16 %v585
      %v618 = vunpack.c.l.b16 %v586
      %v619 = vunpack.c.l.b16 %v587
      %v620 = vunpack.c.l.b16 %v588
      %v621 = vunpack.c.l.b16 %v589
      %v622 = vunpack.c.l.b16 %v590
      %v623 = vunpack.c.l.b16 %v591
      %v624 = vunpack.c.l.b16 %v592
      %v625 = vunpack.c.l.b16 %v593
      %v626 = vunpack.c.l.b16 %v594
      %v627 = vunpack.c.l.b16 %v595
      %v628 = vunpack.c.l.b16 %v596
      %v629 = vunpack.c.l.b16 %v597
      %v630 = vunpack.c.l.b16 %v598
      %v631 = vpack.c.b16 %v616, %v615
      %v632 = vpack.c.b16 %v618, %v617
      %v633 = vpack.c.b16 %v620, %v619
      %v634 = vpack.c.b16 %v622, %v621
      %v635 = vpack.c.b16 %v624, %v623
      %v636 = vpack.c.b16 %v626, %v625
      %v637 = vpack.c.b16 %v628, %v627
      %v638 = vpack.c.b16 %v630, %v629
      %647 = vmatprep.subr.bf16.mxu0 0
      %648 = vmatpush1.bf16.msra.mxu0 %v631
      %649 = vmatprep.subr.bf16.mxu0 0
      %650 = vmatpush1.bf16.msra.mxu0 %v632
      %651 = vmatprep.subr.bf16.mxu0 0
      %652 = vmatpush1.bf16.msra.mxu0 %v633
      %653 = vmatprep.subr.bf16.mxu0 0
      %654 = vmatpush1.bf16.msra.mxu0 %v634
      %655 = vmatprep.subr.bf16.mxu0 0
      %656 = vmatpush1.bf16.msra.mxu0 %v635
      %657 = vmatprep.subr.bf16.mxu0 0
      %658 = vmatpush1.bf16.msra.mxu0 %v636
      %659 = vmatprep.subr.bf16.mxu0 0
      %660 = vmatpush1.bf16.msra.mxu0 %v637
      %661 = vmatprep.subr.bf16.mxu0 0
      %662 = vmatpush1.bf16.msra.mxu0 %v638
      %663 = vmatprep.subr.bf16.mxu0 0
      %664 = vmatpush1.bf16.msra.mxu0 0
      %665 = vmatprep.subr.bf16.mxu0 0
      %666 = vmatpush1.bf16.msra.mxu0 0
      %667 = vmatprep.subr.bf16.mxu0 0
      %668 = vmatpush1.bf16.msra.mxu0 0
      %669 = vmatprep.subr.bf16.mxu0 0
      %670 = vmatpush1.bf16.msra.mxu0 0
      %671 = vmatprep.subr.bf16.mxu0 0
      %672 = vmatpush1.bf16.msra.mxu0 0
      %673 = vmatprep.subr.bf16.mxu0 0
      %674 = vmatpush1.bf16.msra.mxu0 0
      %675 = vmatprep.subr.bf16.mxu0 0
      %676 = vmatpush1.bf16.msra.mxu0 0
      %677 = vmatprep.subr.bf16.mxu0 0
      %678 = vmatpush1.bf16.msra.mxu0 0
      %679 = vmatprep.mubr.bf16.mxu0 0
      %680 = vmatmul.mubr.bf16.gmra.mrb[0].mxu0 %v579
      %v681 = vpop.f32.mrb[0].mxu0
      %v682 = vadd.f32 0.0, %v681
      %v683 = vpop.f32.mrb[0].mxu0
      %v684 = vpop.f32.mrb[0].mxu0
      %v685 = vadd.f32 0.0, %v684
      %v686 = vpop.f32.mrb[0].mxu0
      %687 = vmatprep.mubr.bf16.mxu0 0
      %688 = vmatmul.mubr.bf16.gmra.mrb[0].mxu0 %v580
      %v689 = vpop.f32.mrb[0].mxu0
      %v690 = vadd.f32 0.0, %v689
      %v691 = vpop.f32.mrb[0].mxu0
      %v692 = vpop.f32.mrb[0].mxu0
      %v693 = vadd.f32 0.0, %v692
      %v694 = vpop.f32.mrb[0].mxu0
      %695 = vmatprep.mubr.bf16.mxu0 0
      %696 = vmatmul.mubr.bf16.gmra.mrb[0].mxu0 %v581
      %v697 = vpop.f32.mrb[0].mxu0
      %v698 = vadd.f32 0.0, %v697
      %v699 = vpop.f32.mrb[0].mxu0
      %v700 = vpop.f32.mrb[0].mxu0
      %v701 = vadd.f32 0.0, %v700
      %v702 = vpop.f32.mrb[0].mxu0
      %703 = vmatprep.mubr.bf16.mxu0 0
      %704 = vmatmul.mubr.bf16.gmra.mrb[0].mxu0 %v582
      %v705 = vpop.f32.mrb[0].mxu0
      %v706 = vadd.f32 0.0, %v705
      %v707 = vpop.f32.mrb[0].mxu0
      %v708 = vpop.f32.mrb[0].mxu0
      %v709 = vadd.f32 0.0, %v708
      %v710 = vpop.f32.mrb[0].mxu0
      %711 = vdwg.mxu0
      %v712 = vld [vmem:[#allocation2] sm:$0xff]
      %v713 = vld [vmem:[#allocation2 + $0x8] sm:$0xff]
      %v714 = vld [vmem:[#allocation2 + $0x10] sm:$0xff]
      %v715 = vld [vmem:[#allocation2 + $0x18] sm:$0xff]
      %v716 = vld [vmem:[#allocation2 + $0x20] sm:$0xff]
      %v717 = vld [vmem:[#allocation2 + $0x28] sm:$0xff]
      %v718 = vld [vmem:[#allocation2 + $0x30] sm:$0xff]
      %v719 = vld [vmem:[#allocation2 + $0x38] sm:$0xff]
      %v720 = vadd.f32 %v712, %v682
      %v721 = vadd.f32 %v713, %v685
      %v722 = vadd.f32 %v714, %v690
      %v723 = vadd.f32 %v715, %v693
      %v724 = vadd.f32 %v716, %v698
      %v725 = vadd.f32 %v717, %v701
      %v726 = vadd.f32 %v718, %v706
      %v727 = vadd.f32 %v719, %v709
      %728 = vst [vmem:[#allocation2] sm:$0xff] %v720
      %729 = vst [vmem:[#allocation2 + $0x8] sm:$0xff] %v721
      %730 = vst [vmem:[#allocation2 + $0x10] sm:$0xff] %v722
      %731 = vst [vmem:[#allocation2 + $0x18] sm:$0xff] %v723
      %732 = vst [vmem:[#allocation2 + $0x20] sm:$0xff] %v724
      %733 = vst [vmem:[#allocation2 + $0x28] sm:$0xff] %v725
      %734 = vst [vmem:[#allocation2 + $0x30] sm:$0xff] %v726
      %735 = vst [vmem:[#allocation2 + $0x38] sm:$0xff] %v727
      %p736 = scmp.eq.s32.totalorder %s21, 1
      // Predicated region
      $region45: #{vocab_graph_convolution_forward.1} parent=39 // pred_check
        %p737 = pneg %p736
      $region46: #{vocab_graph_convolution_forward.1} parent=39 // pred_check_branch
        %739 = sbr.rel (%p737) target = $region48
      $region47: #{vocab_graph_convolution_forward.1} parent=39 // pred_region
        %v740 = vld [vmem:[%s4] sm:$0xff]
        %v741 = vld [vmem:[%s4 + $0x8] sm:$0xff]
        %v742 = vld [vmem:[%s4 + $0x10] sm:$0xff]
        %v743 = vld [vmem:[%s4 + $0x18] sm:$0xff]
        %v744 = vld [vmem:[#allocation2] sm:$0xff]
        %v745 = vld [vmem:[#allocation2 + $0x8] sm:$0xff]
        %v746 = vld [vmem:[#allocation2 + $0x10] sm:$0xff]
        %v747 = vld [vmem:[#allocation2 + $0x18] sm:$0xff]
        %v748 = vld [vmem:[#allocation2 + $0x20] sm:$0xff]
        %v749 = vld [vmem:[#allocation2 + $0x28] sm:$0xff]
        %v750 = vld [vmem:[#allocation2 + $0x30] sm:$0xff]
        %v751 = vld [vmem:[#allocation2 + $0x38] sm:$0xff]
        %v752 = vsub.f32 %v740, %v744
        %v753 = vsub.f32 %v741, %v745
        %v754 = vsub.f32 %v742, %v746
        %v755 = vsub.f32 %v743, %v747
        %v756 = vsub.f32 %v740, %v748
        %v757 = vsub.f32 %v741, %v749
        %v758 = vsub.f32 %v742, %v750
        %v759 = vsub.f32 %v743, %v751
        %760 = vst [vmem:[%s306] sm:$0xff] %v752
        %761 = vst [vmem:[%s306 + $0x8] sm:$0xff] %v753
        %762 = vst [vmem:[%s306 + $0x10] sm:$0xff] %v754
        %763 = vst [vmem:[%s306 + $0x18] sm:$0xff] %v755
        %764 = vst [vmem:[%s306 + $0x20] sm:$0xff] %v756
        %765 = vst [vmem:[%s306 + $0x28] sm:$0xff] %v757
        %766 = vst [vmem:[%s306 + $0x30] sm:$0xff] %v758
        %767 = vst [vmem:[%s306 + $0x38] sm:$0xff] %v759
      $region48: #{vocab_graph_convolution_forward.1} parent=39 // pred_fallthru
        _
      %s768 = smul.u32 2, %s20
      %p769 = scmp.lt.s32.totalorder %s768, 1
      %s770 = scalar_select %p769, %s768, 1
      %s771 = smul.addr %s770, 4
      %s772 = smul.addr %s771, 8
      %s773 = scalar_lea.vmem %s5, %s772
      // Predicated region
      $region49: #{vocab_graph_convolution_forward.1} parent=39 // pred_check
        %p774 = pneg %p173
      $region50: #{vocab_graph_convolution_forward.1} parent=39 // pred_check_branch
        %776 = sbr.rel (%p774) target = $region52
      $region51: #{vocab_graph_convolution_forward.1} parent=39 // pred_region
        %s777 = smul.u32 2, %s20
      $region52: #{vocab_graph_convolution_forward.1} parent=39 // pred_fallthru
        _
      // Predicated region
      $region53: #{vocab_graph_convolution_forward.1} parent=39 // pred_check
        %p778 = pneg %p173
      $region54: #{vocab_graph_convolution_forward.1} parent=39 // pred_check_branch
        %780 = sbr.rel (%p778) target = $region56
      $region55: #{vocab_graph_convolution_forward.1} parent=39 // pred_region
        %s781 = smul.u32 2, %s20
        %p782 = scmp.lt.s32.totalorder %s781, 1
        %s783 = scalar_select %p782, %s781, 1
        %s784 = smul.addr %s783, 4
        %s785 = smul.addr %s784, 8
        %s786 = scalar_lea.vmem %s5, %s785
      $region56: #{vocab_graph_convolution_forward.1} parent=39 // pred_fallthru
        _
    $region40: #{vocab_graph_convolution_forward.1} parent=5 // pred_fallthru
      _
    %p787 = scmp.le.s32.totalorder 2, %s11
    // Predicated region
    $region57: #{vocab_graph_convolution_forward.1} parent=5 // pred_check
      %p788 = pneg %p787
    $region58: #{vocab_graph_convolution_forward.1} parent=5 // pred_check_branch
      %790 = sbr.rel (%p788) target = $region60
    $region59: #{vocab_graph_convolution_forward.1} parent=5 // pred_region
      %s791 = ssub.s32 %s11, 2
    $region60: #{vocab_graph_convolution_forward.1} parent=5 // pred_fallthru
      _
  $region6: #{vocab_graph_convolution_forward.1} parent=0 // loop_footer
    %s15 = sadd.s32 1, %s11
  $region7: #{vocab_graph_convolution_forward.1} parent=0 // loop_footer_branch
    %10 = sbr.rel target = $region3
  $region8: #{vocab_graph_convolution_forward.1} parent=0 // loop_exit
    _

</llo_original>
